<compile_context>
chip_gen: v7x
topology: tpu7x:2x2x1
jax: 0.10.0
libtpu: 0.0.40
codegen_flags: <defaults>
</compile_context>

<pallas_src>
import math

import jax
import jax.numpy as jnp
from jax.experimental import pallas as pl
from jax.experimental.pallas import tpu as pltpu

VMEM = pltpu.MemorySpace.VMEM


# ----------------------------- tiling helpers -------------------------------

def _pick_tile(dim, pref, align):
    """Largest multiple of `align` <= pref that exactly divides `dim`;
    falls back to the full dimension (a full-dim block is always legal
    w.r.t. the (8,128) constraint).  Exact division avoids edge-padding
    garbage in the K reduction."""
    if dim <= pref:
        return dim
    t = (pref // align) * align
    while t >= align:
        if dim % t == 0:
            return t
        t -= align
    return dim


# ----------------------------- Pallas kernels ------------------------------

def _make_matmul_bias_kernel(activation):
    """Tiled matmul: out = act(x @ w + b).  Grid = (M tiles, N tiles, K tiles),
    reduction axis last; f32 accumulator scratch."""

    def kernel(x_ref, w_ref, b_ref, o_ref, acc_ref):
        @pl.when(pl.program_id(2) == 0)
        def _init():
            acc_ref[...] = jnp.zeros_like(acc_ref)

        acc_ref[...] += jnp.dot(x_ref[...], w_ref[...],
                                preferred_element_type=jnp.float32)

        @pl.when(pl.program_id(2) == pl.num_programs(2) - 1)
        def _finalize():
            y = acc_ref[...] + b_ref[...]
            if activation == "gelu":
                # tanh-approx GELU (f32 math; XLM-R uses exact erf GELU)
                y = 0.5 * y * (1.0 + jnp.tanh(
                    0.7978845608028654 * (y + 0.044715 * y * y * y)))
            o_ref[...] = y.astype(o_ref.dtype)

    return kernel


def _matmul_bias_add_ln_kernel(x_ref, w_ref, b_ref, res_ref, g_ref, beta_ref,
                               o_ref, acc_ref):
    """Fused: LayerNorm(x @ w + b + residual).  Grid = (M tiles, K tiles);
    the N (=hidden) axis is kept whole so the LN reduction sees full rows."""
    @pl.when(pl.program_id(1) == 0)
    def _init():
        acc_ref[...] = jnp.zeros_like(acc_ref)

    acc_ref[...] += jnp.dot(x_ref[...], w_ref[...],
                            preferred_element_type=jnp.float32)

    @pl.when(pl.program_id(1) == pl.num_programs(1) - 1)
    def _finalize():
        y = acc_ref[...] + b_ref[...] + res_ref[...].astype(jnp.float32)
        mu = jnp.mean(y, axis=-1, keepdims=True)
        var = jnp.mean((y - mu) ** 2, axis=-1, keepdims=True)
        o_ref[...] = ((y - mu) * jax.lax.rsqrt(var + 1e-5) * g_ref[...]
                      + beta_ref[...]).astype(o_ref.dtype)


def _layernorm_kernel(x_ref, g_ref, b_ref, o_ref):
    x = x_ref[...].astype(jnp.float32)
    mu = jnp.mean(x, axis=-1, keepdims=True)
    var = jnp.mean((x - mu) ** 2, axis=-1, keepdims=True)
    o_ref[...] = ((x - mu) * jax.lax.rsqrt(var + 1e-5) * g_ref[...]
                  + b_ref[...]).astype(o_ref.dtype)


def _make_attention_kernel(scale):
    """One (batch*head) per grid step: scores are (S,S) only."""

    def kernel(q_ref, k_ref, v_ref, mask_ref, o_ref):
        q = q_ref[0]                                  # (S, Dh) bf16
        k = k_ref[0]
        v = v_ref[0]
        s = jax.lax.dot_general(q, k, (((1,), (1,)), ((), ())),
                                preferred_element_type=jnp.float32)
        s = s * scale + mask_ref[0]                   # (S,S) + (1,S)
        m = jnp.max(s, axis=-1, keepdims=True)
        p = jnp.exp(s - m)
        p = p * pl.reciprocal(jnp.sum(p, axis=-1, keepdims=True), approx=True)
        o_ref[0] = jnp.dot(p.astype(v.dtype), v,
                           preferred_element_type=jnp.float32
                           ).astype(o_ref.dtype)

    return kernel


def _make_xent_kernel(num_valid_classes):
    """Mean token-level CE over all rows; logits are lane-padded to 128
    columns, padded columns masked in-kernel; labels arrive as int32 and the
    one-hot is built in-register via an iota compare."""

    def kernel(logits_ref, labels_ref, loss_ref):
        logits = logits_ref[...]                               # (M, Cpad) f32
        col = jax.lax.broadcasted_iota(jnp.int32, logits.shape, 1)
        lg = jnp.where(col < num_valid_classes, logits, jnp.float32(-1e30))
        m = jnp.max(lg, axis=-1, keepdims=True)
        lse = jnp.log(jnp.sum(jnp.exp(lg - m), axis=-1, keepdims=True)) + m
        tgt = jnp.sum(jnp.where(col == labels_ref[...], lg, 0.0),
                      axis=-1, keepdims=True)
        loss_ref[...] = jnp.mean(lse - tgt, keepdims=True)     # (1,1)

    return kernel


# ------------------------------- wrappers -----------------------------------

def pallas_matmul_bias(x, w, b, activation="none", out_dtype=jnp.bfloat16):
    M, K = x.shape
    K2, N = w.shape
    assert K == K2
    tm = _pick_tile(M, 256, 8)
    tk = _pick_tile(K, 512, 128)
    tn = _pick_tile(N, 512, 128)
    grid = (M // tm, N // tn, K // tk)
    return pl.pallas_call(
        _make_matmul_bias_kernel(activation),
        out_shape=jax.ShapeDtypeStruct((M, N), out_dtype),
        grid=grid,
        in_specs=[
            pl.BlockSpec((tm, tk), lambda i, j, k: (i, k)),
            pl.BlockSpec((tk, tn), lambda i, j, k: (k, j)),
            pl.BlockSpec((1, tn), lambda i, j, k: (0, j)),
        ],
        out_specs=pl.BlockSpec((tm, tn), lambda i, j, k: (i, j)),
        scratch_shapes=[pltpu.VMEM((tm, tn), jnp.float32)],
        compiler_params=pltpu.CompilerParams(
            dimension_semantics=("parallel", "parallel", "arbitrary")),
    )(x, w, b.reshape(1, N).astype(jnp.float32))


def pallas_matmul_bias_add_ln(x, w, b, residual, gamma, beta,
                              out_dtype=jnp.bfloat16):
    M, K = x.shape
    _, N = w.shape
    tm = _pick_tile(M, 256, 8)
    tk = _pick_tile(K, 512, 128)
    grid = (M // tm, K // tk)
    return pl.pallas_call(
        _matmul_bias_add_ln_kernel,
        out_shape=jax.ShapeDtypeStruct((M, N), out_dtype),
        grid=grid,
        in_specs=[
            pl.BlockSpec((tm, tk), lambda i, k: (i, k)),
            pl.BlockSpec((tk, N), lambda i, k: (k, 0)),
            pl.BlockSpec((1, N), lambda i, k: (0, 0)),
            pl.BlockSpec((tm, N), lambda i, k: (i, 0)),
            pl.BlockSpec((1, N), lambda i, k: (0, 0)),
            pl.BlockSpec((1, N), lambda i, k: (0, 0)),
        ],
        out_specs=pl.BlockSpec((tm, N), lambda i, k: (i, 0)),
        scratch_shapes=[pltpu.VMEM((tm, N), jnp.float32)],
        compiler_params=pltpu.CompilerParams(
            dimension_semantics=("parallel", "arbitrary")),
    )(x, w, b.reshape(1, N).astype(jnp.float32), residual,
      gamma.reshape(1, N).astype(jnp.float32),
      beta.reshape(1, N).astype(jnp.float32))


def pallas_layernorm(x, gamma, beta, out_dtype=jnp.bfloat16):
    M, H = x.shape
    tm = _pick_tile(M, 512, 8)
    return pl.pallas_call(
        _layernorm_kernel,
        out_shape=jax.ShapeDtypeStruct((M, H), out_dtype),
        grid=(M // tm,),
        in_specs=[
            pl.BlockSpec((tm, H), lambda i: (i, 0)),
            pl.BlockSpec((1, H), lambda i: (0, 0)),
            pl.BlockSpec((1, H), lambda i: (0, 0)),
        ],
        out_specs=pl.BlockSpec((tm, H), lambda i: (i, 0)),
        compiler_params=pltpu.CompilerParams(
            dimension_semantics=("parallel",)),
    )(x, gamma.reshape(1, H).astype(jnp.float32),
      beta.reshape(1, H).astype(jnp.float32))


def pallas_attention(q, k, v, addmask, n_heads):
    # q, k, v: (B*H, S, Dh) bf16; addmask: (B, 1, S) f32 additive
    BH, S, Dh = q.shape
    return pl.pallas_call(
        _make_attention_kernel(1.0 / math.sqrt(Dh)),
        out_shape=jax.ShapeDtypeStruct((BH, S, Dh), jnp.bfloat16),
        grid=(BH,),
        in_specs=[
            pl.BlockSpec((1, S, Dh), lambda bh: (bh, 0, 0)),
            pl.BlockSpec((1, S, Dh), lambda bh: (bh, 0, 0)),
            pl.BlockSpec((1, S, Dh), lambda bh: (bh, 0, 0)),
            # mask broadcast per-batch via index_map (no jnp.repeat to B*H)
            pl.BlockSpec((1, 1, S), lambda bh, nh=n_heads: (bh // nh, 0, 0)),
        ],
        out_specs=pl.BlockSpec((1, S, Dh), lambda bh: (bh, 0, 0)),
        compiler_params=pltpu.CompilerParams(
            dimension_semantics=("parallel",)),
    )(q, k, v, addmask)


def pallas_cross_entropy(logits_padded, labels, num_classes):
    M, _ = logits_padded.shape
    return pl.pallas_call(
        _make_xent_kernel(num_classes),
        out_shape=jax.ShapeDtypeStruct((1, 1), jnp.float32),
        in_specs=[pl.BlockSpec(memory_space=VMEM),
                  pl.BlockSpec(memory_space=VMEM)],
        out_specs=pl.BlockSpec(memory_space=VMEM),
    )(logits_padded, labels.reshape(M, 1).astype(jnp.int32))


# ---------------------------- parameter init --------------------------------

def init_params(key, vocab, max_pos, hidden, n_layers, n_heads, ffn,
                num_labels, labels_pad=128):
    def nrm(k, shape, scale=0.02, dtype=jnp.float32):
        return (jax.random.normal(k, shape, jnp.float32) * scale).astype(dtype)

    keys = iter(jax.random.split(key, 8 + 8 * n_layers))

    cls_w = nrm(next(keys), (hidden, num_labels))
    cls_w_pad = jnp.zeros((hidden, labels_pad),
                          jnp.float32).at[:, :num_labels].set(cls_w)

    p = {
        'n_heads': n_heads,
        'num_labels': num_labels,
        'word_emb': nrm(next(keys), (vocab, hidden)),
        'pos_emb': nrm(next(keys), (max_pos, hidden)),
        'type_emb': nrm(next(keys), (1, hidden)),
        'emb_ln_g': jnp.ones((hidden,), jnp.float32),
        'emb_ln_b': jnp.zeros((hidden,), jnp.float32),
        'cls_w': cls_w_pad.astype(jnp.bfloat16),          # lane-dense (H,128)
        'cls_b': jnp.zeros((labels_pad,), jnp.float32),
        'layers': [],
    }
    for _ in range(n_layers):
        wq = nrm(next(keys), (hidden, hidden))
        wk = nrm(next(keys), (hidden, hidden))
        wv = nrm(next(keys), (hidden, hidden))
        layer = {
            'w_qkv': jnp.concatenate([wq, wk, wv], axis=1).astype(jnp.bfloat16),
            'b_qkv': jnp.zeros((3 * hidden,), jnp.float32),
            'wo': nrm(next(keys), (hidden, hidden), dtype=jnp.bfloat16),
            'bo': jnp.zeros((hidden,), jnp.float32),
            'ln1_g': jnp.ones((hidden,), jnp.float32),
            'ln1_b': jnp.zeros((hidden,), jnp.float32),
            'w1': nrm(next(keys), (hidden, ffn), dtype=jnp.bfloat16),
            'b1': jnp.zeros((ffn,), jnp.float32),
            'w2': nrm(next(keys), (ffn, hidden), dtype=jnp.bfloat16),
            'b2': jnp.zeros((hidden,), jnp.float32),
            'ln2_g': jnp.ones((hidden,), jnp.float32),
            'ln2_b': jnp.zeros((hidden,), jnp.float32),
        }
        p['layers'].append(layer)
    return p


# ------------------------------- forward ------------------------------------

def cross_lingual_forward(params, input_ids, attention_mask, ner_labels=None,
                          pad_id=1):
    B, S = input_ids.shape
    H = params['word_emb'].shape[1]
    n_heads = params['n_heads']
    Dh = H // n_heads
    M = B * S

    # --- embeddings (table gathers are XLA glue; LayerNorm is Pallas) ---
    pos_mask = (input_ids != pad_id).astype(jnp.int32)
    position_ids = jnp.cumsum(pos_mask, axis=1) * pos_mask + pad_id  # RoBERTa
    emb = (params['word_emb'][input_ids]
           + params['pos_emb'][position_ids]
           + params['type_emb'][0][None, None, :])
    x = pallas_layernorm(emb.reshape(M, H),
                         params['emb_ln_g'], params['emb_ln_b'])      # bf16
    # Dropout(0.1) -> identity (eval mode)

    addmask = ((1.0 - attention_mask.astype(jnp.float32)) * -1e9
               ).reshape(B, 1, S)                                     # (B,1,S)

    for layer in params['layers']:
        # fused QKV projection: one MXU pass over x
        qkv = pallas_matmul_bias(x, layer['w_qkv'], layer['b_qkv'])   # (M,3H)
        # TODO(synk): head split/merge transposes stay in XLA; Dh is not
        # 128-aligned so per-head column slicing via BlockSpec is not legal.
        qkv = qkv.reshape(B, S, 3, n_heads, Dh).transpose(2, 0, 3, 1, 4)
        q = qkv[0].reshape(B * n_heads, S, Dh)
        k = qkv[1].reshape(B * n_heads, S, Dh)
        v = qkv[2].reshape(B * n_heads, S, Dh)

        ctx = pallas_attention(q, k, v, addmask, n_heads)             # bf16
        ctx = ctx.reshape(B, n_heads, S, Dh).transpose(0, 2, 1, 3).reshape(M, H)

        # Wo projection + residual + LayerNorm fused into one kernel
        x = pallas_matmul_bias_add_ln(ctx, layer['wo'], layer['bo'],
                                      x, layer['ln1_g'], layer['ln1_b'])

        # FFN: GELU fused into w1 matmul; add+LN fused into w2 matmul
        inter = pallas_matmul_bias(x, layer['w1'], layer['b1'],
                                   activation="gelu")
        x = pallas_matmul_bias_add_ln(inter, layer['w2'], layer['b2'],
                                      x, layer['ln2_g'], layer['ln2_b'])

    # classifier head (dropout identity); lane-dense 128-wide logits
    logits_pad = pallas_matmul_bias(x, params['cls_w'], params['cls_b'],
                                    out_dtype=jnp.float32)            # (M,128)
    C = params['num_labels']
    logits = logits_pad[:, :C].reshape(B, S, C)

    loss = None
    if ner_labels is not None:
        loss = pallas_cross_entropy(logits_pad, ner_labels.reshape(-1), C)[0, 0]
    return loss, logits


# --------------------------------- main --------------------------------------

if __name__ == "__main__":
    # small shapes consistent with the module's forward
    B, S = 2, 8
    VOCAB, HIDDEN, LAYERS, HEADS, FFN = 64, 32, 2, 2, 64
    NUM_LABELS = 9          # len(global_label_list)
    PAD_ID = 1
    MAX_POS = S + PAD_ID + 2

    key = jax.random.PRNGKey(0)
    kp, kid, klab = jax.random.split(key, 3)

    params = init_params(kp, VOCAB, MAX_POS, HIDDEN, LAYERS, HEADS, FFN,
                         NUM_LABELS)

    input_ids = jax.random.randint(kid, (B, S), 2, VOCAB, dtype=jnp.int32)
    attention_mask = jnp.ones((B, S), jnp.int32).at[1, 6:].set(0)
    input_ids = jnp.where(attention_mask == 1, input_ids, PAD_ID)
    ner_labels = jax.random.randint(klab, (B, S), 0, NUM_LABELS,
                                    dtype=jnp.int32)

    loss, logits = cross_lingual_forward(params, input_ids, attention_mask,
                                         ner_labels)
    jax.block_until_ready((loss, logits))
    assert logits.shape == (B, S, NUM_LABELS)
    assert bool(jnp.isfinite(loss)) and bool(jnp.all(jnp.isfinite(logits)))
    print("KERNEL_OK")
</pallas_src>

<mosaic_0001>
module attributes {stable_mosaic.version = 11 : i64} {
  func.func @_layernorm_kernel(%arg0: i32, %arg1: memref<16x32xf32, #tpu.memory_space<vmem>>, %arg2: memref<1x32xf32, #tpu.memory_space<vmem>>, %arg3: memref<1x32xf32, #tpu.memory_space<vmem>>, %arg4: memref<16x32xbf16, #tpu.memory_space<vmem>>) attributes {dimension_semantics = [#tpu.dimension_semantics<parallel>], iteration_bounds = array<i64: 1>, scalar_prefetch = 0 : i64, scratch_operands = 0 : i64, tpu.core_type = #tpu.core_type<tc>, window_params = [{transform_indices = @transform_0, window_bounds = array<i64: 16, 32>}, {pipeline_mode = #tpu.pipeline_mode<synchronous>, transform_indices = @transform_1, window_bounds = array<i64: 1, 32>}, {pipeline_mode = #tpu.pipeline_mode<synchronous>, transform_indices = @transform_2, window_bounds = array<i64: 1, 32>}, {transform_indices = @transform_3, window_bounds = array<i64: 16, 32>}]} {
    %c0 = arith.constant 0 : index
    %c0_0 = arith.constant 0 : index
    %0 = vector.load %arg1[%c0, %c0_0] : memref<16x32xf32, #tpu.memory_space<vmem>>, vector<16x32xf32>
    %cst = arith.constant dense<0.000000e+00> : vector<16xf32>
    %1 = vector.multi_reduction <add>, %0, %cst [1] : vector<16x32xf32> to vector<16xf32>
    %2 = vector.shape_cast %1 : vector<16xf32> to vector<16x1xf32>
    %cst_1 = arith.constant 3.200000e+01 : f32
    %3 = vector.broadcast %cst_1 : f32 to vector<16x1xf32>
    %4 = arith.divf %2, %3 : vector<16x1xf32>
    %5 = vector.broadcast %4 : vector<16x1xf32> to vector<16x32xf32>
    %6 = arith.subf %0, %5 : vector<16x32xf32>
    %7 = arith.mulf %6, %6 : vector<16x32xf32>
    %cst_2 = arith.constant dense<0.000000e+00> : vector<16xf32>
    %8 = vector.multi_reduction <add>, %7, %cst_2 [1] : vector<16x32xf32> to vector<16xf32>
    %9 = vector.shape_cast %8 : vector<16xf32> to vector<16x1xf32>
    %cst_3 = arith.constant 3.200000e+01 : f32
    %10 = vector.broadcast %cst_3 : f32 to vector<16x1xf32>
    %11 = arith.divf %9, %10 : vector<16x1xf32>
    %12 = vector.broadcast %4 : vector<16x1xf32> to vector<16x32xf32>
    %13 = arith.subf %0, %12 : vector<16x32xf32>
    %cst_4 = arith.constant 9.99999974E-6 : f32
    %14 = vector.broadcast %cst_4 : f32 to vector<16x1xf32>
    %15 = arith.addf %11, %14 : vector<16x1xf32>
    %16 = math.rsqrt %15 : vector<16x1xf32>
    %17 = vector.broadcast %16 : vector<16x1xf32> to vector<16x32xf32>
    %18 = arith.mulf %13, %17 : vector<16x32xf32>
    %c0_5 = arith.constant 0 : index
    %c0_6 = arith.constant 0 : index
    %19 = vector.load %arg2[%c0_5, %c0_6] : memref<1x32xf32, #tpu.memory_space<vmem>>, vector<1x32xf32>
    %20 = vector.broadcast %19 : vector<1x32xf32> to vector<16x32xf32>
    %21 = arith.mulf %18, %20 : vector<16x32xf32>
    %c0_7 = arith.constant 0 : index
    %c0_8 = arith.constant 0 : index
    %22 = vector.load %arg3[%c0_7, %c0_8] : memref<1x32xf32, #tpu.memory_space<vmem>>, vector<1x32xf32>
    %23 = vector.broadcast %22 : vector<1x32xf32> to vector<16x32xf32>
    %24 = arith.addf %21, %23 : vector<16x32xf32>
    %25 = arith.truncf %24 : vector<16x32xf32> to vector<16x32xbf16>
    %c0_9 = arith.constant 0 : index
    %c0_10 = arith.constant 0 : index
    %26 = vector.load %arg4[%c0_9, %c0_10] : memref<16x32xbf16, #tpu.memory_space<vmem>>, vector<16x32xbf16>
    tpu.vector_store %arg4[%c0_9, %c0_10], %25 {strides = array<i32>} : memref<16x32xbf16, #tpu.memory_space<vmem>>, vector<16x32xbf16>,
    return
  }
  func.func @transform_0(%arg0: i32) -> (i32, i32) {
    %c0_i32 = arith.constant 0 : i32
    %c0_i32_0 = arith.constant 0 : i32
    return %arg0, %c0_i32 : i32, i32
  }
  func.func @transform_1(%arg0: i32) -> (i32, i32) {
    %c0_i32 = arith.constant 0 : i32
    %c0_i32_0 = arith.constant 0 : i32
    %c0_i32_1 = arith.constant 0 : i32
    return %c0_i32, %c0_i32_0 : i32, i32
  }
  func.func @transform_2(%arg0: i32) -> (i32, i32) {
    %c0_i32 = arith.constant 0 : i32
    %c0_i32_0 = arith.constant 0 : i32
    %c0_i32_1 = arith.constant 0 : i32
    return %c0_i32, %c0_i32_0 : i32, i32
  }
  func.func @transform_3(%arg0: i32) -> (i32, i32) {
    %c0_i32 = arith.constant 0 : i32
    %c0_i32_0 = arith.constant 0 : i32
    return %arg0, %c0_i32 : i32, i32
  }
}

</mosaic_0001>

<llo_original>
// kernel: tpu_custom_call.1
$region0: #{tpu_custom_call.1}
  #allocation0 [shape = 'u32[]', space=smem, size = 0x4, offset = 0x4, fixed_abs, tag = 'smem constant byte address 0x4 - core index']
  #allocation1 [shape = 'u32[144,128]{1,0:T(1,128)}', space=vmem, size = 0x12000, scoped, tag = 'internal scratch']
  %s0 = inlined_call_operand.hbm [shape: f32[16,32], index: 0, kind: input, shape index: {}]
  %s1 = inlined_call_operand.vmem [shape: f32[1,32], index: 1, kind: input, shape index: {}]
  %s2 = inlined_call_operand.vmem [shape: f32[1,32], index: 2, kind: input, shape index: {}]
  %s3 = inlined_call_operand.hbm [shape: bf16[16,32], index: 3, kind: output, shape index: {}]
  %s4 = sld [smem:[#allocation0]]
  $region26: #{tpu_custom_call.1} parent=0
    _
  %s6 = ssub.s32 1, %s4
  %s7 = scalar_select 0, %s6, %s4
  $region1: #{tpu_custom_call.1} parent=0
    #allocation2 [shape = 'u8[8192]{0}', space=vmem, size = 0x2000, scoped, tag = 'input window, operand 0, single buffered']
    #allocation3 [shape = 's32[1]{0}', space=sflag, size = 0x4, scoped, tag = 'scoped memory for tpu_custom_call.1']
    #allocation4 [shape = 's32[1]{0}', space=sflag, size = 0x4, scoped, tag = 'scoped memory for tpu_custom_call.1']
    #allocation5 [shape = 'u8[4096]{0}', space=vmem, size = 0x1000, scoped, tag = 'output window, operand 0, single buffered']
    %8 = vsyncpa [#allocation3], 0
    %9 = vsyncpa [#allocation4], 0
    // Predicated region
    $region2: #{tpu_custom_call.1} parent=1 // pred_check
      _
    $region3: #{tpu_custom_call.1} parent=1 // pred_check_branch
      %11 = sbr.rel (0) target = $region5
    $region4: #{tpu_custom_call.1} parent=1 // pred_region
      %s13 = ssub.s32 256, 256
      %14 = vsyncadd [#allocation3], %s13
      %s15 = sshll.u32 [#allocation2], 4
      %s16 = int_to_ptr.vmem [resolvable:$true] %s15
      %21 = dma.hbm_to_vmem [thread:$0]  %s0, 256, %s16, [#allocation3], 128, 128, 8
    $region5: #{tpu_custom_call.1} parent=1 // pred_fallthru
      _
    // Predicated region
    $region6: #{tpu_custom_call.1} parent=1 // pred_check
      _
    $region7: #{tpu_custom_call.1} parent=1 // pred_check_branch
      %23 = sbr.rel (0) target = $region9
    $region8: #{tpu_custom_call.1} parent=1 // pred_region
      _
    $region9: #{tpu_custom_call.1} parent=1 // pred_fallthru
      _
    // Predicated region
    $region10: #{tpu_custom_call.1} parent=1 // pred_check
      _
    $region11: #{tpu_custom_call.1} parent=1 // pred_check_branch
      %25 = sbr.rel (0) target = $region13
    $region12: #{tpu_custom_call.1} parent=1 // pred_region
      _
    $region13: #{tpu_custom_call.1} parent=1 // pred_fallthru
      _
    // Predicated region
    $region14: #{tpu_custom_call.1} parent=1 // pred_check
      _
    $region15: #{tpu_custom_call.1} parent=1 // pred_check_branch
      %27 = sbr.rel (0) target = $region17
    $region16: #{tpu_custom_call.1} parent=1 // pred_region
      %28 = dma.done [#allocation3], 256
    $region17: #{tpu_custom_call.1} parent=1 // pred_fallthru
      _
    %v29 = vld [vmem:[#allocation2] sm:$0xff]
    %v30 = vld [vmem:[#allocation2 + $0x8] sm:$0xff]
    %vm31 = vcmask 261120
    %v32 = vsel %vm31, %v29, 0.0
    %33 = vadd.xlane.f32.xlu0 %v32
    %v34 = vpop.xlane.xlu0 %33
    %v35 = vsel %vm31, %v30, 0.0
    %36 = vadd.xlane.f32.xlu0 %v35
    %v37 = vpop.xlane.xlu0 %36
    %v38 = vrcp.pop 32.0
    %v39 = vmul.f32 %v34, %v38
    %v40 = vmul.f32 %v37, %v38
    %v41 = vsub.f32 %v29, %v39
    %v42 = vsub.f32 %v30, %v40
    %v43 = vmul.f32 %v41, %v41
    %v44 = vmul.f32 %v42, %v42
    %v45 = vsel %vm31, %v43, 0.0
    %46 = vadd.xlane.f32.xlu0 %v45
    %v47 = vpop.xlane.xlu0 %46
    %v48 = vsel %vm31, %v44, 0.0
    %49 = vadd.xlane.f32.xlu0 %v48
    %v50 = vpop.xlane.xlu0 %49
    %v51 = vmul.f32 %v47, %v38
    %v52 = vmul.f32 %v50, %v38
    %v53 = vadd.f32 %v51, 1e-05
    %v54 = vadd.f32 %v52, 1e-05
    %v55 = vrsqrt.pop %v53
    %v56 = vrsqrt.pop %v54
    %v57 = vmul.f32 %v41, %v55
    %v58 = vmul.f32 %v42, %v56
    %v59 = vld [vmem:[%s1] sm:$0x1]
    %v61 = vlaneseq
    %v62 = vshrl.u32 %v61, 7
    %v63 = vsub.s32 0, %v62
    %v64 = vrot.slane %v59, %v63
    %v66 = vmul.f32 %v57, %v64
    %v67 = vmul.f32 %v58, %v64
    %v68 = vld [vmem:[%s2] sm:$0x1]
    %v70 = vlaneseq
    %v71 = vshrl.u32 %v70, 7
    %v72 = vsub.s32 0, %v71
    %v73 = vrot.slane %v68, %v72
    %v75 = vadd.f32 %v66, %v73
    %v76 = vadd.f32 %v67, %v73
    %v77 = vpack.c.bf16 %v76, %v75
    %v79 = vunpack.c.l.b16 %v77
    %v80 = vunpack.c.h.b16 %v77
    %v81 = vpack.c.b16 %v79, %v79
    %v82 = vpack.c.b16 %v80, %v80
    %vm85 = vcmask 257024
    %86 = vst.msk [vmem:[#allocation5] sm:$0xf] %vm85, %v81
    %87 = vst.msk [vmem:[#allocation5 + $0x4] sm:$0xf] %vm85, %v82
    // Predicated region
    $region18: #{tpu_custom_call.1} parent=1 // pred_check
      _
    $region19: #{tpu_custom_call.1} parent=1 // pred_check_branch
      %89 = sbr.rel (0) target = $region21
    $region20: #{tpu_custom_call.1} parent=1 // pred_region
      %s91 = ssub.s32 128, 128
      %92 = vsyncadd [#allocation4], %s91
      %s93 = sshll.u32 [#allocation5], 4
      %s94 = int_to_ptr.vmem [resolvable:$true] %s93
      %99 = dma.vmem_to_hbm [thread:$0]  %s94, 128, %s3, [#allocation4], 64, 64, 4
    $region21: #{tpu_custom_call.1} parent=1 // pred_fallthru
      _
    // Predicated region
    $region22: #{tpu_custom_call.1} parent=1 // pred_check
      _
    $region23: #{tpu_custom_call.1} parent=1 // pred_check_branch
      %101 = sbr.rel (0) target = $region25
    $region24: #{tpu_custom_call.1} parent=1 // pred_region
      %102 = dma.done [#allocation4], 128
    $region25: #{tpu_custom_call.1} parent=1 // pred_fallthru
      _
    %103 = vsyncpa [#allocation3], 1
    %104 = vsyncpa [#allocation4], 1

</llo_original>
